<compile_context>
chip_gen: v6e
topology: v6e:2x2x1
jax: 0.10.0
libtpu: 0.0.40
codegen_flags: <defaults>
</compile_context>

<pallas_src>
import functools

import jax
import jax.numpy as jnp
import numpy as np
from jax import lax
from jax.experimental import pallas as pl
from jax.experimental.pallas import tpu as pltpu


def cmos_kernel(x_ref, w_eff_ref, b_eff_ref, w_map_ref, b_map_pm_ref, out_ref, *,
                num_map, pred_len, lchunk, mxu_bf16):
    # x_ref:        (L, W)     time on sublanes, packed batch*channel on lanes
    # w_eff_ref:    (M, L, W)  fused conv+gate weights (tiled over batch copies)
    # b_eff_ref:    (M, W)     fused conv+gate bias
    # w_map_ref:    (M*P, L)   block-structured segment-mapping weights (no bias)
    # b_map_pm_ref: (P, M)     mapping bias, contracted against the gate probs
    # out_ref:      (P, W)
    L = x_ref.shape[0]
    M, P = num_map, pred_len

    x = x_ref[...]                                                # (L, W)

    # ---- one-pass instance norm over time (independent sublane reduces) ----
    inv_len = 1.0 / L
    mean = jnp.sum(x, axis=0, keepdims=True) * inv_len            # (1, W)
    ex2 = jnp.sum(x * x, axis=0, keepdims=True) * inv_len         # (1, W)
    var = jnp.maximum(ex2 - mean * mean, 0.0)                     # biased, as torch
    veps = var + 1e-10
    inv_std = lax.rsqrt(veps)                                     # EUP
    stdev = veps * inv_std                                        # == sqrt(var + eps)
    xn = (x - mean) * inv_std                                     # (L, W)

    # ---- gate logits: Conv1d fused into the gate Linear, chunked over L so the
    #      (M, L, W) product is never materialised ----
    def gate_step(t, accs):
        off = pl.multiple_of(t * lchunk, lchunk)
        xs = (x_ref[pl.ds(off, lchunk), :] - mean) * inv_std      # (lchunk, W)
        return tuple(
            acc + jnp.sum(w_eff_ref[m, pl.ds(off, lchunk), :] * xs,
                          axis=0, keepdims=True)
            for m, acc in enumerate(accs))

    accs = lax.fori_loop(0, L // lchunk, gate_step,
                         tuple(b_eff_ref[m:m + 1, :] for m in range(M)),
                         unroll=True)
    logits = jnp.concatenate(accs, axis=0)                        # (M, W)

    # ---- softmax over the M gates ----
    m_max = jnp.max(logits, axis=0, keepdims=True)
    exps = jnp.exp(logits - m_max)                                # EUP
    denom = jnp.sum(exps, axis=0, keepdims=True)
    # exact reciprocal keeps the 1e-4 validation; pl.reciprocal(denom, approx=True)
    # (EUP vrcp, ~2^-12 rel. error) is a further option if the tolerance allows.
    probs = exps * pl.reciprocal(denom)                           # (M, W)

    # ---- all M segment mappings in one MXU matmul; bias folded into a second,
    #      tiny matmul against the gate probabilities ----
    lhs, rhs = w_map_ref[...], xn
    if mxu_bf16:   # v6e/v7x option: bf16 operands, f32 accumulation
        lhs, rhs = lhs.astype(jnp.bfloat16), rhs.astype(jnp.bfloat16)
    mapped = jnp.dot(lhs, rhs, preferred_element_type=jnp.float32)            # (M*P, W)
    y = jnp.dot(b_map_pm_ref[...], probs, preferred_element_type=jnp.float32)  # (P, W)

    # ---- gate-weighted mixture (M small; P multiple of 8 -> aligned vreg views) --
    for i in range(M):
        y = y + mapped[i * P:(i + 1) * P, :] * probs[i:i + 1, :]

    # ---- de-normalize; lane-dense full-block store ----
    out_ref[...] = (y * stdev + mean).astype(out_ref.dtype)


def _pick_batch_tile(bs, c):
    """Batch elements per grid step (block width = Bt*c lanes).

    Prefer widths that are multiples of 128 lanes (unmasked, lane-dense stores)
    near ~512 lanes and an even number of grid steps (v7x has two TensorCores);
    otherwise fall back to the full packed width (one fat step).
    """
    divisors = [bt for bt in range(1, bs + 1) if bs % bt == 0]
    lane_ok = [bt for bt in divisors if (bt * c) % 128 == 0]
    pool = lane_ok if lane_ok else [bs]

    def score(bt):
        lanes, steps = bt * c, bs // bt
        return (abs(lanes - 512), steps % 2, -lanes)

    return min(pool, key=score)


def cmos_forward(x, params, cfg, *, mxu_bf16=False):
    """x: (batch, seq_len, channels) -> (batch, pred_len, channels)."""
    bs, L, c = x.shape
    S, M = cfg["seg_size"], cfg["num_map"]
    K, st = cfg["kernel_size"], cfg["conv_stride"]
    P = cfg["pred_len"]
    conv_dim = (L - K) // st + 1

    x = x.astype(jnp.float32)
    conv_w = params["conv_w"].astype(jnp.float32)                 # (C, K)
    conv_b = params["conv_b"].astype(jnp.float32)                 # (C,)
    gate_w = params["gate_w"].astype(jnp.float32)                 # (M, conv_dim)
    gate_b = params["gate_b"].astype(jnp.float32)                 # (M,)
    map_w = params["map_w"][:M].astype(jnp.float32)               # (M, n_out, n_in)
    map_b = params["map_b"][:M].astype(jnp.float32)               # (M, n_out)

    # --- fuse depthwise conv + gate Linear (exact; the conv is linear) ---
    t_idx, l_idx, k_idx = jnp.arange(conv_dim), jnp.arange(L), jnp.arange(K)
    sel = (l_idx[None, :, None] ==
           t_idx[:, None, None] * st + k_idx[None, None, :]).astype(jnp.float32)
    w_eff = jnp.einsum('mt,tlk,ck->mlc', gate_w, sel, conv_w)     # (M, L, C)
    b_eff = gate_b[:, None] + conv_b[None, :] * jnp.sum(gate_w, axis=1)[:, None]

    # --- block-structured mapping matrix (weights only); bias kept as a (P, M)
    #     matrix contracted with the gate probabilities inside the kernel ---
    p_idx = jnp.arange(P)
    phase = (p_idx[:, None] % S == l_idx[None, :] % S).astype(jnp.float32)   # (P, L)
    w_map = (map_w[:, p_idx // S, :][:, :, l_idx // S] * phase[None]).reshape(M * P, L)
    b_map_pm = map_b[:, p_idx // S].T                                        # (P, M)

    # --- pack batch x channel onto the lane axis ---
    # TODO(synk): if C alone ever exceeds the lane-block budget (C >> 512), also
    # tile the channel axis in 128-multiples with a per-block w_eff index_map.
    Bt = _pick_batch_tile(bs, c)
    Wt = Bt * c
    n_steps = bs // Bt
    total_cols = bs * c
    x_t = jnp.transpose(x, (1, 0, 2)).reshape(L, total_cols)      # col = b*C + ch
    w_eff_t = jnp.tile(w_eff, (1, 1, Bt))                         # (M, L, Wt)
    b_eff_t = jnp.tile(b_eff, (1, Bt))                            # (M, Wt)

    # L-chunk for the gate contraction (8..32 sublanes keeps the transient small)
    lchunk = next((ck for ck in (16, 8) if L % ck == 0), L)

    kernel = functools.partial(cmos_kernel, num_map=M, pred_len=P,
                               lchunk=lchunk, mxu_bf16=mxu_bf16)

    weight_mode = pl.Buffered(buffer_count=1)   # grid-invariant: no double-buffering

    flops = total_cols * (2 * M * L + 2 * M * P * L + 4 * M * P + 10 * L)
    cost = pl.CostEstimate(
        flops=int(flops),
        transcendentals=int(total_cols * (M + 2)),
        bytes_accessed=int(4 * (L * total_cols + P * total_cols + w_eff_t.size
                                + b_eff_t.size + w_map.size + b_map_pm.size)),
    )

    vmem_bytes = 4 * (2 * L * Wt + 2 * P * Wt          # double-buffered x / out blocks
                      + M * L * Wt + M * Wt            # single-buffered weights
                      + M * P * L + P * M)
    vmem_limit = int(min(max(2 * vmem_bytes, 32 << 20), 48 << 20))

    out_t = pl.pallas_call(
        kernel,
        grid=(n_steps,),
        out_shape=jax.ShapeDtypeStruct((P, total_cols), jnp.float32),
        in_specs=[
            pl.BlockSpec((L, Wt), lambda g: (0, g)),              # x slab (per step)
            pl.BlockSpec((M, L, Wt), lambda g: (0, 0, 0),
                         pipeline_mode=weight_mode),              # w_eff (shared)
            pl.BlockSpec((M, Wt), lambda g: (0, 0),
                         pipeline_mode=weight_mode),              # b_eff (shared)
            pl.BlockSpec((M * P, L), lambda g: (0, 0),
                         pipeline_mode=weight_mode),              # w_map (shared)
            pl.BlockSpec((P, M), lambda g: (0, 0),
                         pipeline_mode=weight_mode),              # b_map (shared)
        ],
        out_specs=pl.BlockSpec((P, Wt), lambda g: (0, g)),
        compiler_params=pltpu.CompilerParams(
            dimension_semantics=("parallel",),
            vmem_limit_bytes=vmem_limit),
        cost_estimate=cost,
    )(x_t, w_eff_t, b_eff_t, w_map, b_map_pm)

    return jnp.transpose(out_t.reshape(P, bs, c), (1, 0, 2))      # (B, P, C)


def init_params(key, cfg):
    """Deterministic parameter init (same shapes as the PyTorch module)."""
    c = cfg["c"]
    seq_len, pred_len = cfg["seq_len"], cfg["pred_len"]
    seg_size, num_map = cfg["seg_size"], cfg["num_map"]
    kernel_size, conv_stride = cfg["kernel_size"], cfg["conv_stride"]
    conv_dim = (seq_len - kernel_size) // conv_stride + 1
    n_in, n_out = seq_len // seg_size, pred_len // seg_size

    k = jax.random.split(key, 6)
    # num_map + 1 mapping linears, as in the module (the last one is unused in forward)
    map_w = 0.2 * jax.random.normal(k[0], (num_map + 1, n_out, n_in), jnp.float32)
    map_b = 0.1 * jax.random.normal(k[1], (num_map + 1, n_out), jnp.float32)
    if cfg["use_pi"]:
        period = cfg["period"]
        stride_pi = period // seg_size
        w0 = np.zeros((n_out, n_in), np.float32)
        for i in range(n_out):
            for j in range(n_in - stride_pi, 0, -stride_pi):
                if j + i < n_in:
                    w0[i, j + i] = period / seq_len
        map_w = map_w.at[0].set(jnp.asarray(w0))
        map_b = map_b.at[0].set(jnp.zeros((n_out,), jnp.float32))

    return {
        "conv_w": 0.3 * jax.random.normal(k[2], (c, kernel_size), jnp.float32),
        "conv_b": 0.1 * jax.random.normal(k[3], (c,), jnp.float32),
        "gate_w": 0.3 * jax.random.normal(k[4], (num_map, conv_dim), jnp.float32),
        "gate_b": 0.1 * jax.random.normal(k[5], (num_map,), jnp.float32),
        "map_w": map_w,
        "map_b": map_b,
    }


def cmos_reference(x, params, cfg):
    """Pure-JAX reference mirroring the PyTorch forward, for validation."""
    S, M = cfg["seg_size"], cfg["num_map"]
    K, st = cfg["kernel_size"], cfg["conv_stride"]
    xt = jnp.transpose(x, (0, 2, 1)).astype(jnp.float32)          # (B, C, L)
    B, C, L = xt.shape
    means = xt.mean(2, keepdims=True)
    xc = xt - means
    std = jnp.sqrt(jnp.mean(xc ** 2, axis=2, keepdims=True) + 1e-10)
    xn = xc / std
    conv_dim = (L - K) // st + 1
    cols = jnp.stack([xn[:, :, t * st:t * st + K] for t in range(conv_dim)], axis=2)
    conv = jnp.einsum('bctk,ck->bct', cols, params["conv_w"]) \
        + params["conv_b"][None, :, None]
    gates = jnp.einsum('bct,mt->bcm', conv, params["gate_w"]) \
        + params["gate_b"][None, None, :]
    gates = jax.nn.softmax(gates, axis=-1)
    n_in = L // S
    x_ = jnp.transpose(xn.reshape(B, C, n_in, S), (0, 1, 3, 2))   # (B, C, S, n_in)
    outs = []
    for i in range(M):
        o = jnp.einsum('bcsn,on->bcos', x_, params["map_w"][i]) \
            + params["map_b"][i][None, None, :, None]
        outs.append(o.reshape(B, C, -1))
    x_out = jnp.stack(outs, axis=2)                               # (B, C, M, P)
    y = jnp.einsum('bcns,bcn->bcs', x_out, gates)
    y = y * std + means
    return jnp.transpose(y, (0, 2, 1))


if __name__ == "__main__":
    cfg = dict(
        seq_len=32, pred_len=16, c=4,
        seg_size=4, num_map=3,
        kernel_size=4, conv_stride=2,
        use_pi=True, period=8, dropout=0.1,   # dropout is defined but unused in forward
    )
    key = jax.random.PRNGKey(0)
    k_x, k_p = jax.random.split(key)
    bs = 4
    x = jax.random.normal(k_x, (bs, cfg["seq_len"], cfg["c"]), jnp.float32)
    params = init_params(k_p, cfg)

    y = jax.block_until_ready(cmos_forward(x, params, cfg))
    y_ref = jax.block_until_ready(cmos_reference(x, params, cfg))

    assert y.shape == (bs, cfg["pred_len"], cfg["c"]), y.shape
    np.testing.assert_allclose(np.asarray(y), np.asarray(y_ref), rtol=1e-4, atol=1e-4)
    print("KERNEL_OK")
</pallas_src>

<mosaic_0001>
module attributes {stable_mosaic.version = 11 : i64} {
  func.func @cmos_kernel(%arg0: i32, %arg1: memref<32x16xf32, #tpu.memory_space<vmem>>, %arg2: memref<3x32x16xf32, #tpu.memory_space<vmem>>, %arg3: memref<3x16xf32, #tpu.memory_space<vmem>>, %arg4: memref<48x32xf32, #tpu.memory_space<vmem>>, %arg5: memref<16x3xf32, #tpu.memory_space<vmem>>, %arg6: memref<16x16xf32, #tpu.memory_space<vmem>>) attributes {dimension_semantics = [#tpu.dimension_semantics<parallel>], iteration_bounds = array<i64: 1>, scalar_prefetch = 0 : i64, scratch_operands = 0 : i64, tpu.core_type = #tpu.core_type<tc>, window_params = [{transform_indices = @transform_0, window_bounds = array<i64: 32, 16>}, {pipeline_mode = #tpu.pipeline_mode<synchronous>, transform_indices = @transform_1, window_bounds = array<i64: 3, 32, 16>}, {pipeline_mode = #tpu.pipeline_mode<synchronous>, transform_indices = @transform_2, window_bounds = array<i64: 3, 16>}, {pipeline_mode = #tpu.pipeline_mode<synchronous>, transform_indices = @transform_3, window_bounds = array<i64: 48, 32>}, {pipeline_mode = #tpu.pipeline_mode<synchronous>, transform_indices = @transform_4, window_bounds = array<i64: 16, 3>}, {transform_indices = @transform_5, window_bounds = array<i64: 16, 16>}]} {
    %c0 = arith.constant 0 : index
    %c0_0 = arith.constant 0 : index
    %0 = vector.load %arg1[%c0, %c0_0] : memref<32x16xf32, #tpu.memory_space<vmem>>, vector<32x16xf32>
    %cst = arith.constant dense<0.000000e+00> : vector<16xf32>
    %1 = vector.multi_reduction <add>, %0, %cst [0] : vector<32x16xf32> to vector<16xf32>
    %2 = vector.shape_cast %1 : vector<16xf32> to vector<1x16xf32>
    %cst_1 = arith.constant 3.125000e-02 : f32
    %3 = vector.broadcast %cst_1 : f32 to vector<1x16xf32>
    %4 = arith.mulf %2, %3 : vector<1x16xf32>
    %5 = arith.mulf %0, %0 : vector<32x16xf32>
    %cst_2 = arith.constant dense<0.000000e+00> : vector<16xf32>
    %6 = vector.multi_reduction <add>, %5, %cst_2 [0] : vector<32x16xf32> to vector<16xf32>
    %7 = vector.shape_cast %6 : vector<16xf32> to vector<1x16xf32>
    %cst_3 = arith.constant 3.125000e-02 : f32
    %8 = vector.broadcast %cst_3 : f32 to vector<1x16xf32>
    %9 = arith.mulf %7, %8 : vector<1x16xf32>
    %10 = arith.mulf %4, %4 : vector<1x16xf32>
    %11 = arith.subf %9, %10 : vector<1x16xf32>
    %cst_4 = arith.constant 0.000000e+00 : f32
    %12 = vector.broadcast %cst_4 : f32 to vector<1x16xf32>
    %13 = arith.maximumf %11, %12 : vector<1x16xf32>
    %cst_5 = arith.constant 1.000000e-10 : f32
    %14 = vector.broadcast %cst_5 : f32 to vector<1x16xf32>
    %15 = arith.addf %13, %14 : vector<1x16xf32>
    %16 = math.rsqrt %15 : vector<1x16xf32>
    %17 = arith.mulf %15, %16 : vector<1x16xf32>
    %18 = vector.broadcast %4 : vector<1x16xf32> to vector<32x16xf32>
    %19 = arith.subf %0, %18 : vector<32x16xf32>
    %20 = vector.broadcast %16 : vector<1x16xf32> to vector<32x16xf32>
    %21 = arith.mulf %19, %20 : vector<32x16xf32>
    %c0_6 = arith.constant 0 : index
    %c0_7 = arith.constant 0 : index
    %22 = vector.load %arg3[%c0_6, %c0_7] : memref<3x16xf32, #tpu.memory_space<vmem>>, vector<1x16xf32>
    %c1 = arith.constant 1 : index
    %c0_8 = arith.constant 0 : index
    %23 = vector.load %arg3[%c1, %c0_8] : memref<3x16xf32, #tpu.memory_space<vmem>>, vector<1x16xf32>
    %c2 = arith.constant 2 : index
    %c0_9 = arith.constant 0 : index
    %24 = vector.load %arg3[%c2, %c0_9] : memref<3x16xf32, #tpu.memory_space<vmem>>, vector<1x16xf32>
    %c0_i32 = arith.constant 0 : i32
    %c16_i32 = arith.constant 16 : i32
    %25 = arith.muli %c0_i32, %c16_i32 : i32
    %26 = tpu.assume_multiple %25, 16 : i32
    %27 = arith.index_cast %26 : i32 to index
    %c0_10 = arith.constant 0 : index
    %28 = vector.load %arg1[%27, %c0_10] : memref<32x16xf32, #tpu.memory_space<vmem>>, vector<16x16xf32>
    %29 = vector.broadcast %4 : vector<1x16xf32> to vector<16x16xf32>
    %30 = arith.subf %28, %29 : vector<16x16xf32>
    %31 = vector.broadcast %16 : vector<1x16xf32> to vector<16x16xf32>
    %32 = arith.mulf %30, %31 : vector<16x16xf32>
    %c0_11 = arith.constant 0 : index
    %33 = arith.index_cast %26 : i32 to index
    %c0_12 = arith.constant 0 : index
    %34 = vector.load %arg2[%c0_11, %33, %c0_12] : memref<3x32x16xf32, #tpu.memory_space<vmem>>, vector<1x16x16xf32>
    %35 = vector.shape_cast %34 : vector<1x16x16xf32> to vector<16x16xf32>
    %36 = arith.mulf %35, %32 : vector<16x16xf32>
    %cst_13 = arith.constant dense<0.000000e+00> : vector<16xf32>
    %37 = vector.multi_reduction <add>, %36, %cst_13 [0] : vector<16x16xf32> to vector<16xf32>
    %38 = vector.shape_cast %37 : vector<16xf32> to vector<1x16xf32>
    %39 = arith.addf %22, %38 : vector<1x16xf32>
    %c1_14 = arith.constant 1 : index
    %40 = arith.index_cast %26 : i32 to index
    %c0_15 = arith.constant 0 : index
    %41 = vector.load %arg2[%c1_14, %40, %c0_15] : memref<3x32x16xf32, #tpu.memory_space<vmem>>, vector<1x16x16xf32>
    %42 = vector.shape_cast %41 : vector<1x16x16xf32> to vector<16x16xf32>
    %43 = arith.mulf %42, %32 : vector<16x16xf32>
    %cst_16 = arith.constant dense<0.000000e+00> : vector<16xf32>
    %44 = vector.multi_reduction <add>, %43, %cst_16 [0] : vector<16x16xf32> to vector<16xf32>
    %45 = vector.shape_cast %44 : vector<16xf32> to vector<1x16xf32>
    %46 = arith.addf %23, %45 : vector<1x16xf32>
    %c2_17 = arith.constant 2 : index
    %47 = arith.index_cast %26 : i32 to index
    %c0_18 = arith.constant 0 : index
    %48 = vector.load %arg2[%c2_17, %47, %c0_18] : memref<3x32x16xf32, #tpu.memory_space<vmem>>, vector<1x16x16xf32>
    %49 = vector.shape_cast %48 : vector<1x16x16xf32> to vector<16x16xf32>
    %50 = arith.mulf %49, %32 : vector<16x16xf32>
    %cst_19 = arith.constant dense<0.000000e+00> : vector<16xf32>
    %51 = vector.multi_reduction <add>, %50, %cst_19 [0] : vector<16x16xf32> to vector<16xf32>
    %52 = vector.shape_cast %51 : vector<16xf32> to vector<1x16xf32>
    %53 = arith.addf %24, %52 : vector<1x16xf32>
    %c1_i32 = arith.constant 1 : i32
    %c16_i32_20 = arith.constant 16 : i32
    %54 = arith.muli %c1_i32, %c16_i32_20 : i32
    %55 = tpu.assume_multiple %54, 16 : i32
    %56 = arith.index_cast %55 : i32 to index
    %c0_21 = arith.constant 0 : index
    %57 = vector.load %arg1[%56, %c0_21] : memref<32x16xf32, #tpu.memory_space<vmem>>, vector<16x16xf32>
    %58 = vector.broadcast %4 : vector<1x16xf32> to vector<16x16xf32>
    %59 = arith.subf %57, %58 : vector<16x16xf32>
    %60 = vector.broadcast %16 : vector<1x16xf32> to vector<16x16xf32>
    %61 = arith.mulf %59, %60 : vector<16x16xf32>
    %c0_22 = arith.constant 0 : index
    %62 = arith.index_cast %55 : i32 to index
    %c0_23 = arith.constant 0 : index
    %63 = vector.load %arg2[%c0_22, %62, %c0_23] : memref<3x32x16xf32, #tpu.memory_space<vmem>>, vector<1x16x16xf32>
    %64 = vector.shape_cast %63 : vector<1x16x16xf32> to vector<16x16xf32>
    %65 = arith.mulf %64, %61 : vector<16x16xf32>
    %cst_24 = arith.constant dense<0.000000e+00> : vector<16xf32>
    %66 = vector.multi_reduction <add>, %65, %cst_24 [0] : vector<16x16xf32> to vector<16xf32>
    %67 = vector.shape_cast %66 : vector<16xf32> to vector<1x16xf32>
    %68 = arith.addf %39, %67 : vector<1x16xf32>
    %c1_25 = arith.constant 1 : index
    %69 = arith.index_cast %55 : i32 to index
    %c0_26 = arith.constant 0 : index
    %70 = vector.load %arg2[%c1_25, %69, %c0_26] : memref<3x32x16xf32, #tpu.memory_space<vmem>>, vector<1x16x16xf32>
    %71 = vector.shape_cast %70 : vector<1x16x16xf32> to vector<16x16xf32>
    %72 = arith.mulf %71, %61 : vector<16x16xf32>
    %cst_27 = arith.constant dense<0.000000e+00> : vector<16xf32>
    %73 = vector.multi_reduction <add>, %72, %cst_27 [0] : vector<16x16xf32> to vector<16xf32>
    %74 = vector.shape_cast %73 : vector<16xf32> to vector<1x16xf32>
    %75 = arith.addf %46, %74 : vector<1x16xf32>
    %c2_28 = arith.constant 2 : index
    %76 = arith.index_cast %55 : i32 to index
    %c0_29 = arith.constant 0 : index
    %77 = vector.load %arg2[%c2_28, %76, %c0_29] : memref<3x32x16xf32, #tpu.memory_space<vmem>>, vector<1x16x16xf32>
    %78 = vector.shape_cast %77 : vector<1x16x16xf32> to vector<16x16xf32>
    %79 = arith.mulf %78, %61 : vector<16x16xf32>
    %cst_30 = arith.constant dense<0.000000e+00> : vector<16xf32>
    %80 = vector.multi_reduction <add>, %79, %cst_30 [0] : vector<16x16xf32> to vector<16xf32>
    %81 = vector.shape_cast %80 : vector<16xf32> to vector<1x16xf32>
    %82 = arith.addf %53, %81 : vector<1x16xf32>
    %c2_i32 = arith.constant 2 : i32
    %83 = tpu.concatenate %68, %75, %82 in 0 : vector<1x16xf32>, vector<1x16xf32>, vector<1x16xf32> -> vector<3x16xf32>
    %cst_31 = arith.constant dense<0xFF800000> : vector<16xf32>
    %84 = vector.multi_reduction <maximumf>, %83, %cst_31 [0] : vector<3x16xf32> to vector<16xf32>
    %85 = vector.shape_cast %84 : vector<16xf32> to vector<1x16xf32>
    %86 = vector.broadcast %85 : vector<1x16xf32> to vector<3x16xf32>
    %87 = arith.subf %83, %86 : vector<3x16xf32>
    %88 = math.exp %87 : vector<3x16xf32>
    %cst_32 = arith.constant dense<0.000000e+00> : vector<16xf32>
    %89 = vector.multi_reduction <add>, %88, %cst_32 [0] : vector<3x16xf32> to vector<16xf32>
    %90 = vector.shape_cast %89 : vector<16xf32> to vector<1x16xf32>
    %91 = tpu.reciprocal %90 : vector<1x16xf32> -> vector<1x16xf32>
    %92 = vector.broadcast %91 : vector<1x16xf32> to vector<3x16xf32>
    %93 = arith.mulf %88, %92 : vector<3x16xf32>
    %c0_33 = arith.constant 0 : index
    %c0_34 = arith.constant 0 : index
    %94 = vector.load %arg4[%c0_33, %c0_34] : memref<48x32xf32, #tpu.memory_space<vmem>>, vector<48x32xf32>
    %cst_35 = arith.constant dense<0.000000e+00> : vector<48x16xf32>
    %95 = tpu.matmul %94, %21, %cst_35 {dimension_numbers = #tpu.dot_dimension_numbers<[1], [0], [0], [1], [0, 0, 1, 1], [], []>} : vector<48x32xf32>, vector<32x16xf32>, vector<48x16xf32> -> vector<48x16xf32>
    %c0_36 = arith.constant 0 : index
    %c0_37 = arith.constant 0 : index
    %96 = vector.load %arg5[%c0_36, %c0_37] : memref<16x3xf32, #tpu.memory_space<vmem>>, vector<16x3xf32>
    %cst_38 = arith.constant dense<0.000000e+00> : vector<16x16xf32>
    %97 = tpu.matmul %96, %93, %cst_38 {dimension_numbers = #tpu.dot_dimension_numbers<[1], [0], [0], [1], [0, 0, 1, 1], [], []>} : vector<16x3xf32>, vector<3x16xf32>, vector<16x16xf32> -> vector<16x16xf32>
    %98 = vector.extract_strided_slice %95 {offsets = [0, 0], sizes = [16, 16], strides = [1, 1]} : vector<48x16xf32> to vector<16x16xf32>
    %99 = vector.extract_strided_slice %93 {offsets = [0, 0], sizes = [1, 16], strides = [1, 1]} : vector<3x16xf32> to vector<1x16xf32>
    %100 = vector.broadcast %99 : vector<1x16xf32> to vector<16x16xf32>
    %101 = arith.mulf %98, %100 : vector<16x16xf32>
    %102 = arith.addf %97, %101 : vector<16x16xf32>
    %103 = vector.extract_strided_slice %95 {offsets = [16, 0], sizes = [16, 16], strides = [1, 1]} : vector<48x16xf32> to vector<16x16xf32>
    %104 = vector.extract_strided_slice %93 {offsets = [1, 0], sizes = [1, 16], strides = [1, 1]} : vector<3x16xf32> to vector<1x16xf32>
    %105 = vector.broadcast %104 : vector<1x16xf32> to vector<16x16xf32>
    %106 = arith.mulf %103, %105 : vector<16x16xf32>
    %107 = arith.addf %102, %106 : vector<16x16xf32>
    %108 = vector.extract_strided_slice %95 {offsets = [32, 0], sizes = [16, 16], strides = [1, 1]} : vector<48x16xf32> to vector<16x16xf32>
    %109 = vector.extract_strided_slice %93 {offsets = [2, 0], sizes = [1, 16], strides = [1, 1]} : vector<3x16xf32> to vector<1x16xf32>
    %110 = vector.broadcast %109 : vector<1x16xf32> to vector<16x16xf32>
    %111 = arith.mulf %108, %110 : vector<16x16xf32>
    %112 = arith.addf %107, %111 : vector<16x16xf32>
    %113 = vector.broadcast %17 : vector<1x16xf32> to vector<16x16xf32>
    %114 = arith.mulf %112, %113 : vector<16x16xf32>
    %115 = vector.broadcast %4 : vector<1x16xf32> to vector<16x16xf32>
    %116 = arith.addf %114, %115 : vector<16x16xf32>
    %c0_39 = arith.constant 0 : index
    %c0_40 = arith.constant 0 : index
    %117 = vector.load %arg6[%c0_39, %c0_40] : memref<16x16xf32, #tpu.memory_space<vmem>>, vector<16x16xf32>
    tpu.vector_store %arg6[%c0_39, %c0_40], %116 {strides = array<i32>} : memref<16x16xf32, #tpu.memory_space<vmem>>, vector<16x16xf32>,
    return
  }
  func.func @transform_0(%arg0: i32) -> (i32, i32) {
    %c0_i32 = arith.constant 0 : i32
    %c0_i32_0 = arith.constant 0 : i32
    return %c0_i32, %arg0 : i32, i32
  }
  func.func @transform_1(%arg0: i32) -> (i32, i32, i32) {
    %c0_i32 = arith.constant 0 : i32
    %c0_i32_0 = arith.constant 0 : i32
    %c0_i32_1 = arith.constant 0 : i32
    %c0_i32_2 = arith.constant 0 : i32
    return %c0_i32, %c0_i32_0, %c0_i32_1 : i32, i32, i32
  }
  func.func @transform_2(%arg0: i32) -> (i32, i32) {
    %c0_i32 = arith.constant 0 : i32
    %c0_i32_0 = arith.constant 0 : i32
    %c0_i32_1 = arith.constant 0 : i32
    return %c0_i32, %c0_i32_0 : i32, i32
  }
  func.func @transform_3(%arg0: i32) -> (i32, i32) {
    %c0_i32 = arith.constant 0 : i32
    %c0_i32_0 = arith.constant 0 : i32
    %c0_i32_1 = arith.constant 0 : i32
    return %c0_i32, %c0_i32_0 : i32, i32
  }
  func.func @transform_4(%arg0: i32) -> (i32, i32) {
    %c0_i32 = arith.constant 0 : i32
    %c0_i32_0 = arith.constant 0 : i32
    %c0_i32_1 = arith.constant 0 : i32
    return %c0_i32, %c0_i32_0 : i32, i32
  }
  func.func @transform_5(%arg0: i32) -> (i32, i32) {
    %c0_i32 = arith.constant 0 : i32
    %c0_i32_0 = arith.constant 0 : i32
    return %c0_i32, %arg0 : i32, i32
  }
}

</mosaic_0001>

<llo_original>
// kernel: tpu_custom_call.1
$region0: #{tpu_custom_call.1}
  #allocation0 [shape = 'u32[]', space=smem, size = 0x4, offset = 0x4, fixed_abs, tag = 'smem constant byte address 0x4 - core index']
  #allocation1 [shape = 'u32[144,128]{1,0:T(1,128)}', space=vmem, size = 0x12000, scoped, tag = 'internal scratch']
  %s0 = inlined_call_operand.vmem [shape: f32[32,16], index: 0, kind: input, shape index: {}]
  %s1 = inlined_call_operand.vmem [shape: f32[3,32,16], index: 1, kind: input, shape index: {}]
  %s2 = inlined_call_operand.vmem [shape: f32[3,16], index: 2, kind: input, shape index: {}]
  %s3 = inlined_call_operand.vmem [shape: f32[48,32], index: 3, kind: input, shape index: {}]
  %s4 = inlined_call_operand.vmem [shape: f32[16,3], index: 4, kind: input, shape index: {}]
  %s5 = inlined_call_operand.hbm [shape: f32[16,16], index: 5, kind: output, shape index: {}]
  %s6 = sld [smem:[#allocation0]]
  $region30: #{tpu_custom_call.1} parent=0
    _
  %s8 = ssub.s32 1, %s6
  %s9 = scalar_select 0, %s8, %s6
  $region1: #{tpu_custom_call.1} parent=0
    #allocation2 [shape = 'u8[8192]{0}', space=vmem, size = 0x2000, scoped, tag = 'output window, operand 0, single buffered']
    #allocation3 [shape = 's32[1]{0}', space=sflag, size = 0x4, scoped, tag = 'scoped memory for tpu_custom_call.1']
    %10 = vsyncpa [#allocation3], 0
    // Predicated region
    $region2: #{tpu_custom_call.1} parent=1 // pred_check
      _
    $region3: #{tpu_custom_call.1} parent=1 // pred_check_branch
      %12 = sbr.rel (0) target = $region5
    $region4: #{tpu_custom_call.1} parent=1 // pred_region
      _
    $region5: #{tpu_custom_call.1} parent=1 // pred_fallthru
      _
    // Predicated region
    $region6: #{tpu_custom_call.1} parent=1 // pred_check
      _
    $region7: #{tpu_custom_call.1} parent=1 // pred_check_branch
      %14 = sbr.rel (0) target = $region9
    $region8: #{tpu_custom_call.1} parent=1 // pred_region
      _
    $region9: #{tpu_custom_call.1} parent=1 // pred_fallthru
      _
    // Predicated region
    $region10: #{tpu_custom_call.1} parent=1 // pred_check
      _
    $region11: #{tpu_custom_call.1} parent=1 // pred_check_branch
      %16 = sbr.rel (0) target = $region13
    $region12: #{tpu_custom_call.1} parent=1 // pred_region
      _
    $region13: #{tpu_custom_call.1} parent=1 // pred_fallthru
      _
    // Predicated region
    $region14: #{tpu_custom_call.1} parent=1 // pred_check
      _
    $region15: #{tpu_custom_call.1} parent=1 // pred_check_branch
      %18 = sbr.rel (0) target = $region17
    $region16: #{tpu_custom_call.1} parent=1 // pred_region
      _
    $region17: #{tpu_custom_call.1} parent=1 // pred_fallthru
      _
    // Predicated region
    $region18: #{tpu_custom_call.1} parent=1 // pred_check
      _
    $region19: #{tpu_custom_call.1} parent=1 // pred_check_branch
      %20 = sbr.rel (0) target = $region21
    $region20: #{tpu_custom_call.1} parent=1 // pred_region
      _
    $region21: #{tpu_custom_call.1} parent=1 // pred_fallthru
      _
    %v21 = vld [vmem:[%s0] sm:$0xff]
    %v22 = vld [vmem:[%s0 + $0x8] sm:$0xff]
    %v23 = vld [vmem:[%s0 + $0x10] sm:$0xff]
    %v24 = vld [vmem:[%s0 + $0x18] sm:$0xff]
    %vm25 = vcmask 130048
    %v26 = vsel %vm25, %v21, 0.0
    %v27 = vsel %vm25, %v22, 0.0
    %v28 = vadd.f32 %v26, %v27
    %v29 = vsel %vm25, %v23, 0.0
    %v30 = vadd.f32 %v28, %v29
    %v31 = vsel %vm25, %v24, 0.0
    %v32 = vadd.f32 %v30, %v31
    %v33 = vrot.slane %v32, 4
    %v34 = vadd.f32 %v32, %v33
    %v35 = vrot.slane %v34, 2
    %v36 = vadd.f32 %v34, %v35
    %v37 = vrot.slane %v36, 1
    %v38 = vadd.f32 %v36, %v37
    %v39 = vmul.f32 %v38, 0.03125
    %v40 = vmul.f32 %v21, %v21
    %v41 = vmul.f32 %v22, %v22
    %v42 = vmul.f32 %v23, %v23
    %v43 = vmul.f32 %v24, %v24
    %v44 = vsel %vm25, %v40, 0.0
    %v45 = vsel %vm25, %v41, 0.0
    %v46 = vadd.f32 %v44, %v45
    %v47 = vsel %vm25, %v42, 0.0
    %v48 = vadd.f32 %v46, %v47
    %v49 = vsel %vm25, %v43, 0.0
    %v50 = vadd.f32 %v48, %v49
    %v51 = vrot.slane %v50, 4
    %v52 = vadd.f32 %v50, %v51
    %v53 = vrot.slane %v52, 2
    %v54 = vadd.f32 %v52, %v53
    %v55 = vrot.slane %v54, 1
    %v56 = vadd.f32 %v54, %v55
    %v57 = vmul.f32 %v56, 0.03125
    %v58 = vmul.f32 %v39, %v39
    %v59 = vsub.f32 %v57, %v58
    %v60 = vmax.f32 %v59, 0.0
    %v61 = vadd.f32 %v60, 1e-10
    %v62 = vrsqrt.pop %v61
    %v63 = vmul.f32 %v61, %v62
    %v64 = vsub.f32 %v21, %v39
    %v65 = vsub.f32 %v22, %v39
    %v66 = vsub.f32 %v23, %v39
    %v67 = vsub.f32 %v24, %v39
    %v68 = vmul.f32 %v64, %v62
    %v69 = vmul.f32 %v65, %v62
    %v70 = vmul.f32 %v66, %v62
    %v71 = vmul.f32 %v67, %v62
    %v72 = vld [vmem:[%s2] sm:$0x1]
    %v73 = vld [vmem:[%s2 + $0x1] sm:$0x1]
    %v74 = vld [vmem:[%s2 + $0x2] sm:$0x1]
    %v75 = vld [vmem:[%s0] sm:$0xff]
    %v76 = vld [vmem:[%s0 + $0x8] sm:$0xff]
    %v77 = vsub.f32 %v75, %v39
    %v78 = vsub.f32 %v76, %v39
    %v79 = vmul.f32 %v77, %v62
    %v80 = vmul.f32 %v78, %v62
    %v81 = vld [vmem:[%s1] sm:$0xff]
    %v82 = vld [vmem:[%s1 + $0x8] sm:$0xff]
    %v83 = vmul.f32 %v81, %v79
    %v84 = vmul.f32 %v82, %v80
    %v85 = vsel %vm25, %v83, 0.0
    %v86 = vsel %vm25, %v84, 0.0
    %v87 = vadd.f32 %v85, %v86
    %v88 = vrot.slane %v87, 4
    %v89 = vadd.f32 %v87, %v88
    %v90 = vrot.slane %v89, 2
    %v91 = vadd.f32 %v89, %v90
    %v92 = vrot.slane %v91, 1
    %v93 = vadd.f32 %v91, %v92
    %v94 = vadd.f32 %v72, %v93
    %s95 = sadd.s32 0, 32
    %s96 = scalar_lea.vmem %s1, %s95
    %v97 = vld [vmem:[%s96] sm:$0xff]
    %v98 = vld [vmem:[%s96 + $0x8] sm:$0xff]
    %v99 = vmul.f32 %v97, %v79
    %v100 = vmul.f32 %v98, %v80
    %v101 = vsel %vm25, %v99, 0.0
    %v102 = vsel %vm25, %v100, 0.0
    %v103 = vadd.f32 %v101, %v102
    %v104 = vrot.slane %v103, 4
    %v105 = vadd.f32 %v103, %v104
    %v106 = vrot.slane %v105, 2
    %v107 = vadd.f32 %v105, %v106
    %v108 = vrot.slane %v107, 1
    %v109 = vadd.f32 %v107, %v108
    %v110 = vadd.f32 %v73, %v109
    %s111 = sadd.s32 0, 64
    %s112 = scalar_lea.vmem %s1, %s111
    %v113 = vld [vmem:[%s112] sm:$0xff]
    %v114 = vld [vmem:[%s112 + $0x8] sm:$0xff]
    %v115 = vmul.f32 %v113, %v79
    %v116 = vmul.f32 %v114, %v80
    %v117 = vsel %vm25, %v115, 0.0
    %v118 = vsel %vm25, %v116, 0.0
    %v119 = vadd.f32 %v117, %v118
    %v120 = vrot.slane %v119, 4
    %v121 = vadd.f32 %v119, %v120
    %v122 = vrot.slane %v121, 2
    %v123 = vadd.f32 %v121, %v122
    %v124 = vrot.slane %v123, 1
    %v125 = vadd.f32 %v123, %v124
    %v126 = vadd.f32 %v74, %v125
    %s127 = scalar_lea.vmem %s0, 16
    %v128 = vld [vmem:[%s127] sm:$0xff]
    %v129 = vld [vmem:[%s127 + $0x8] sm:$0xff]
    %v130 = vsub.f32 %v128, %v39
    %v131 = vsub.f32 %v129, %v39
    %v132 = vmul.f32 %v130, %v62
    %v133 = vmul.f32 %v131, %v62
    %s134 = scalar_lea.vmem %s1, 16
    %v135 = vld [vmem:[%s134] sm:$0xff]
    %v136 = vld [vmem:[%s134 + $0x8] sm:$0xff]
    %v137 = vmul.f32 %v135, %v132
    %v138 = vmul.f32 %v136, %v133
    %v139 = vsel %vm25, %v137, 0.0
    %v140 = vsel %vm25, %v138, 0.0
    %v141 = vadd.f32 %v139, %v140
    %v142 = vrot.slane %v141, 4
    %v143 = vadd.f32 %v141, %v142
    %v144 = vrot.slane %v143, 2
    %v145 = vadd.f32 %v143, %v144
    %v146 = vrot.slane %v145, 1
    %v147 = vadd.f32 %v145, %v146
    %v148 = vadd.f32 %v94, %v147
    %s149 = sadd.s32 16, 32
    %s150 = scalar_lea.vmem %s1, %s149
    %v151 = vld [vmem:[%s150] sm:$0xff]
    %v152 = vld [vmem:[%s150 + $0x8] sm:$0xff]
    %v153 = vmul.f32 %v151, %v132
    %v154 = vmul.f32 %v152, %v133
    %v155 = vsel %vm25, %v153, 0.0
    %v156 = vsel %vm25, %v154, 0.0
    %v157 = vadd.f32 %v155, %v156
    %v158 = vrot.slane %v157, 4
    %v159 = vadd.f32 %v157, %v158
    %v160 = vrot.slane %v159, 2
    %v161 = vadd.f32 %v159, %v160
    %v162 = vrot.slane %v161, 1
    %v163 = vadd.f32 %v161, %v162
    %v164 = vadd.f32 %v110, %v163
    %s165 = sadd.s32 16, 64
    %s166 = scalar_lea.vmem %s1, %s165
    %v167 = vld [vmem:[%s166] sm:$0xff]
    %v168 = vld [vmem:[%s166 + $0x8] sm:$0xff]
    %v169 = vmul.f32 %v167, %v132
    %v170 = vmul.f32 %v168, %v133
    %v171 = vsel %vm25, %v169, 0.0
    %v172 = vsel %vm25, %v170, 0.0
    %v173 = vadd.f32 %v171, %v172
    %v174 = vrot.slane %v173, 4
    %v175 = vadd.f32 %v173, %v174
    %v176 = vrot.slane %v175, 2
    %v177 = vadd.f32 %v175, %v176
    %v178 = vrot.slane %v177, 1
    %v179 = vadd.f32 %v177, %v178
    %v180 = vadd.f32 %v126, %v179
    %v182 = vrot.slane %v164, 7
    %v185 = vrot.slane %v180, 6
    %vm187 = vcmask 1040384
    %v188 = vsel %vm187, %v148, %v182
    %vm189 = vcmask 1041408
    %v190 = vsel %vm189, %v188, %v185
    %vm191 = vcmask 124928
    %v192 = vsel %vm191, %v190, -inf
    %v193 = vrot.slane %v192, 4
    %v194 = vmax.f32 %v192, %v193
    %v195 = vrot.slane %v194, 2
    %v196 = vmax.f32 %v194, %v195
    %v197 = vrot.slane %v196, 1
    %v198 = vmax.f32 %v196, %v197
    %v199 = vsub.f32 %v190, %v198
    %v200 = vmul.f32 %v199, 1.442695
    %v201 = vpow.pop %v200
    %v202 = vsel %vm191, %v201, 0.0
    %v203 = vrot.slane %v202, 4
    %v204 = vadd.f32 %v202, %v203
    %v205 = vrot.slane %v204, 2
    %v206 = vadd.f32 %v204, %v205
    %v207 = vrot.slane %v206, 1
    %v208 = vadd.f32 %v206, %v207
    %v209 = vrcp.pop %v208
    %v210 = vmul.f32 %v201, %v209
    %v211 = vld [vmem:[%s3] sm:$0xff]
    %v212 = vld [vmem:[%s3 + $0x8] sm:$0xff]
    %v213 = vld [vmem:[%s3 + $0x10] sm:$0xff]
    %v214 = vld [vmem:[%s3 + $0x18] sm:$0xff]
    %v215 = vld [vmem:[%s3 + $0x20] sm:$0xff]
    %v216 = vld [vmem:[%s3 + $0x28] sm:$0xff]
    %vm217 = vcmask 261120
    %v219 = vsel %vm217, %v211, 0
    %v222 = vsel %vm217, %v212, 0
    %v225 = vsel %vm217, %v213, 0
    %v228 = vsel %vm217, %v214, 0
    %v231 = vsel %vm217, %v215, 0
    %v234 = vsel %vm217, %v216, 0
    %236 = vmatprep.subr.mxu0 0.0
    %237 = vmatpush1.msra.mxu0 0.0
    %238 = vmatprep.subr.mxu0 0.0
    %239 = vmatpush1.msra.mxu0 0.0
    %240 = vmatprep.subr.mxu0 0.0
    %241 = vmatpush1.msra.mxu0 0.0
    %242 = vmatprep.subr.mxu0 0.0
    %243 = vmatpush1.msra.mxu0 0.0
    %244 = vmatprep.subr.mxu0 0.0
    %245 = vmatpush1.msra.mxu0 0.0
    %246 = vmatprep.subr.mxu0 0.0
    %247 = vmatpush1.msra.mxu0 0.0
    %248 = vmatprep.subr.mxu0 0.0
    %249 = vmatpush1.msra.mxu0 0.0
    %250 = vmatprep.subr.mxu0 0.0
    %251 = vmatpush1.msra.mxu0 0.0
    %252 = vmatprep.subr.mxu0 0.0
    %253 = vmatpush1.msra.mxu0 0.0
    %254 = vmatprep.subr.mxu0 0.0
    %255 = vmatpush1.msra.mxu0 0.0
    %256 = vmatprep.subr.mxu0 0.0
    %257 = vmatpush1.msra.mxu0 0.0
    %258 = vmatprep.subr.mxu0 0.0
    %259 = vmatpush1.msra.mxu0 0.0
    %260 = vmatprep.subr.mxu0 0.0
    %261 = vmatpush1.msra.mxu0 %v71
    %262 = vmatprep.subr.mxu0 0.0
    %263 = vmatpush1.msra.mxu0 %v70
    %264 = vmatprep.subr.mxu0 0.0
    %265 = vmatpush1.msra.mxu0 %v69
    %266 = vmatprep.subr.mxu0 0.0
    %267 = vmatpush1.msra.mxu0 %v68
    %268 = vmatprep.subr.mxu0 0.0
    %269 = vmatpush2.msra.mxu0 0.0
    %270 = vmatprep.subr.mxu0 0.0
    %271 = vmatpush2.msra.mxu0 0.0
    %272 = vmatprep.subr.mxu0 0.0
    %273 = vmatpush2.msra.mxu0 0.0
    %274 = vmatprep.subr.mxu0 0.0
    %275 = vmatpush2.msra.mxu0 0.0
    %276 = vmatprep.subr.mxu0 0.0
    %277 = vmatpush2.msra.mxu0 0.0
    %278 = vmatprep.subr.mxu0 0.0
    %279 = vmatpush2.msra.mxu0 0.0
    %280 = vmatprep.subr.mxu0 0.0
    %281 = vmatpush2.msra.mxu0 0.0
    %282 = vmatprep.subr.mxu0 0.0
    %283 = vmatpush2.msra.mxu0 0.0
    %284 = vmatprep.subr.mxu0 0.0
    %285 = vmatpush2.msra.mxu0 0.0
    %286 = vmatprep.subr.mxu0 0.0
    %287 = vmatpush2.msra.mxu0 0.0
    %288 = vmatprep.subr.mxu0 0.0
    %289 = vmatpush2.msra.mxu0 0.0
    %290 = vmatprep.subr.mxu0 0.0
    %291 = vmatpush2.msra.mxu0 0.0
    %292 = vmatprep.subr.mxu0 0.0
    %293 = vmatpush2.msra.mxu0 0.0
    %294 = vmatprep.subr.mxu0 0.0
    %295 = vmatpush2.msra.mxu0 0.0
    %296 = vmatprep.subr.mxu0 0.0
    %297 = vmatpush2.msra.mxu0 0.0
    %298 = vmatprep.subr.mxu0 0.0
    %299 = vmatpush2.msra.mxu0 0.0
    %300 = vmatprep.mubr.f32.mxu0 0.0
    %301 = vmatmul.mubr.f32.gmra.mxu0 %v219
    %v302 = vpop.f32.mrf.mxu0
    %v303 = vadd.f32 0.0, %v302
    %v304 = vpop.f32.mrf.mxu0
    %305 = vmatprep.mubr.f32.mxu0 0.0
    %306 = vmatmul.mubr.f32.gmra.mxu0 %v222
    %v307 = vpop.f32.mrf.mxu0
    %v308 = vadd.f32 0.0, %v307
    %v309 = vpop.f32.mrf.mxu0
    %310 = vmatprep.mubr.f32.mxu0 0.0
    %311 = vmatmul.mubr.f32.gmra.mxu0 %v225
    %v312 = vpop.f32.mrf.mxu0
    %v313 = vadd.f32 0.0, %v312
    %v314 = vpop.f32.mrf.mxu0
    %315 = vmatprep.mubr.f32.mxu0 0.0
    %316 = vmatmul.mubr.f32.gmra.mxu0 %v228
    %v317 = vpop.f32.mrf.mxu0
    %v318 = vadd.f32 0.0, %v317
    %v319 = vpop.f32.mrf.mxu0
    %320 = vmatprep.mubr.f32.mxu0 0.0
    %321 = vmatmul.mubr.f32.gmra.mxu0 %v231
    %v322 = vpop.f32.mrf.mxu0
    %v323 = vadd.f32 0.0, %v322
    %v324 = vpop.f32.mrf.mxu0
    %325 = vmatprep.mubr.f32.mxu0 0.0
    %326 = vmatmul.mubr.f32.gmra.mxu0 %v234
    %v327 = vpop.f32.mrf.mxu0
    %v328 = vadd.f32 0.0, %v327
    %v329 = vpop.f32.mrf.mxu0
    %330 = vdwg.mxu0
    %v331 = vld [vmem:[%s4] sm:$0xff]
    %v332 = vld [vmem:[%s4 + $0x8] sm:$0xff]
    %v333 = vlaneseq
    %v334 = vshrl.u32 %v333, 7
    %v335 = vsub.s32 0, %v334
    %v336 = vrot.slane %v210, %v335
    %v337 = vmul.f32 %v303, %v336
    %v338 = vmul.f32 %v308, %v336
    %vm339 = vcmask 23552
    %v341 = vsel %vm339, %v331, 0
    %v344 = vsel %vm339, %v332, 0
    %vm346 = vcmask 1042432
    %v348 = vsel %vm346, %v210, 0
    %350 = vmatprep.subr.mxu0 0.0
    %351 = vmatpush1.msra.mxu0 0.0
    %352 = vmatprep.subr.mxu0 0.0
    %353 = vmatpush1.msra.mxu0 0.0
    %354 = vmatprep.subr.mxu0 0.0
    %355 = vmatpush1.msra.mxu0 0.0
    %356 = vmatprep.subr.mxu0 0.0
    %357 = vmatpush1.msra.mxu0 0.0
    %358 = vmatprep.subr.mxu0 0.0
    %359 = vmatpush1.msra.mxu0 0.0
    %360 = vmatprep.subr.mxu0 0.0
    %361 = vmatpush1.msra.mxu0 0.0
    %362 = vmatprep.subr.mxu0 0.0
    %363 = vmatpush1.msra.mxu0 0.0
    %364 = vmatprep.subr.mxu0 0.0
    %365 = vmatpush1.msra.mxu0 0.0
    %366 = vmatprep.subr.mxu0 0.0
    %367 = vmatpush1.msra.mxu0 0.0
    %368 = vmatprep.subr.mxu0 0.0
    %369 = vmatpush1.msra.mxu0 0.0
    %370 = vmatprep.subr.mxu0 0.0
    %371 = vmatpush1.msra.mxu0 0.0
    %372 = vmatprep.subr.mxu0 0.0
    %373 = vmatpush1.msra.mxu0 0.0
    %374 = vmatprep.subr.mxu0 0.0
    %375 = vmatpush1.msra.mxu0 0.0
    %376 = vmatprep.subr.mxu0 0.0
    %377 = vmatpush1.msra.mxu0 0.0
    %378 = vmatprep.subr.mxu0 0.0
    %379 = vmatpush1.msra.mxu0 0.0
    %380 = vmatprep.subr.mxu0 0.0
    %381 = vmatpush1.msra.mxu0 %v348
    %382 = vmatprep.subr.mxu0 0.0
    %383 = vmatpush2.msra.mxu0 0.0
    %384 = vmatprep.subr.mxu0 0.0
    %385 = vmatpush2.msra.mxu0 0.0
    %386 = vmatprep.subr.mxu0 0.0
    %387 = vmatpush2.msra.mxu0 0.0
    %388 = vmatprep.subr.mxu0 0.0
    %389 = vmatpush2.msra.mxu0 0.0
    %390 = vmatprep.subr.mxu0 0.0
    %391 = vmatpush2.msra.mxu0 0.0
    %392 = vmatprep.subr.mxu0 0.0
    %393 = vmatpush2.msra.mxu0 0.0
    %394 = vmatprep.subr.mxu0 0.0
    %395 = vmatpush2.msra.mxu0 0.0
    %396 = vmatprep.subr.mxu0 0.0
    %397 = vmatpush2.msra.mxu0 0.0
    %398 = vmatprep.subr.mxu0 0.0
    %399 = vmatpush2.msra.mxu0 0.0
    %400 = vmatprep.subr.mxu0 0.0
    %401 = vmatpush2.msra.mxu0 0.0
    %402 = vmatprep.subr.mxu0 0.0
    %403 = vmatpush2.msra.mxu0 0.0
    %404 = vmatprep.subr.mxu0 0.0
    %405 = vmatpush2.msra.mxu0 0.0
    %406 = vmatprep.subr.mxu0 0.0
    %407 = vmatpush2.msra.mxu0 0.0
    %408 = vmatprep.subr.mxu0 0.0
    %409 = vmatpush2.msra.mxu0 0.0
    %410 = vmatprep.subr.mxu0 0.0
    %411 = vmatpush2.msra.mxu0 0.0
    %412 = vmatprep.subr.mxu0 0.0
    %413 = vmatpush2.msra.mxu0 0.0
    %414 = vmatprep.mubr.f32.mxu0 0.0
    %415 = vmatmul.mubr.f32.gmra.mxu0 %v341
    %v416 = vpop.f32.mrf.mxu0
    %v417 = vadd.f32 %v337, %v416
    %v418 = vpop.f32.mrf.mxu0
    %419 = vmatprep.mubr.f32.mxu0 0.0
    %420 = vmatmul.mubr.f32.gmra.mxu0 %v344
    %v421 = vpop.f32.mrf.mxu0
    %v422 = vadd.f32 %v338, %v421
    %v423 = vpop.f32.mrf.mxu0
    %424 = vdwg.mxu0
    %v425 = vlaneseq
    %v426 = vshrl.u32 %v425, 7
    %v427 = vsub.s32 1, %v426
    %v428 = vrot.slane %v210, %v427
    %v429 = vmul.f32 %v313, %v428
    %v430 = vmul.f32 %v318, %v428
    %v431 = vadd.f32 %v417, %v429
    %v432 = vadd.f32 %v422, %v430
    %v433 = vlaneseq
    %v434 = vshrl.u32 %v433, 7
    %v435 = vsub.s32 2, %v434
    %v436 = vrot.slane %v210, %v435
    %v437 = vmul.f32 %v323, %v436
    %v438 = vmul.f32 %v328, %v436
    %v439 = vadd.f32 %v431, %v437
    %v440 = vadd.f32 %v432, %v438
    %v441 = vmul.f32 %v439, %v63
    %v442 = vmul.f32 %v440, %v63
    %v443 = vadd.f32 %v441, %v39
    %v444 = vadd.f32 %v442, %v39
    %445 = vst.msk [vmem:[#allocation2] sm:$0xff] %vm25, %v443
    %446 = vst.msk [vmem:[#allocation2 + $0x8] sm:$0xff] %vm25, %v444
    // Predicated region
    $region22: #{tpu_custom_call.1} parent=1 // pred_check
      _
    $region23: #{tpu_custom_call.1} parent=1 // pred_check_branch
      %448 = sbr.rel (0) target = $region25
    $region24: #{tpu_custom_call.1} parent=1 // pred_region
      %s450 = ssub.s32 256, 256
      %451 = vsyncadd [#allocation3], %s450
      %s452 = sshll.u32 [#allocation2], 4
      %s453 = int_to_ptr.vmem [resolvable:$true] %s452
      %458 = dma.vmem_to_hbm [thread:$0]  %s453, 256, %s5, [#allocation3], 128, 128, 8
    $region25: #{tpu_custom_call.1} parent=1 // pred_fallthru
      _
    // Predicated region
    $region26: #{tpu_custom_call.1} parent=1 // pred_check
      _
    $region27: #{tpu_custom_call.1} parent=1 // pred_check_branch
      %460 = sbr.rel (0) target = $region29
    $region28: #{tpu_custom_call.1} parent=1 // pred_region
      %461 = dma.done [#allocation3], 256
    $region29: #{tpu_custom_call.1} parent=1 // pred_fallthru
      _
    %462 = vsyncpa [#allocation3], 1

</llo_original>
